<compile_context>
chip_gen: v6e
topology: v6e:2x2x1
jax: 0.10.0
libtpu: 0.0.40
codegen_flags: <defaults>
</compile_context>

<pallas_src>
import functools

import jax
import jax.numpy as jnp
from jax.experimental import pallas as pl
from jax.experimental.pallas import tpu as pltpu

_LANE = 128          # TPU lane width: narrow contraction dims are padded to this
_H1, _H2 = 64, 32    # hidden widths of the PyTorch module


def _mlp_kernel(x_ref, w1_ref, b1_ref, w2_ref, b2_ref, w3_ref, b3_ref, o_ref, *,
                num_classes):
    # fc1 + ReLU (cast x in-kernel -> free VPU work hidden under the input DMA;
    # f32 accumulation on the MXU, bias add / ReLU in f32)
    x = x_ref[...].astype(w1_ref.dtype)
    h1 = jnp.dot(x, w1_ref[...], preferred_element_type=jnp.float32)
    h1 = jnp.maximum(h1 + b1_ref[...], 0.0)
    # fc2 + ReLU
    h2 = jnp.dot(h1.astype(w2_ref.dtype), w2_ref[...], preferred_element_type=jnp.float32)
    h2 = jnp.maximum(h2 + b2_ref[...], 0.0)
    # fc3 (logits): compute on the 128-lane padded weights, slice back to C lanes,
    # add the (1, C) bias and store the slim (tile, C) block.
    out = jnp.dot(h2.astype(w3_ref.dtype), w3_ref[...], preferred_element_type=jnp.float32)
    o_ref[...] = (out[:, :num_classes] + b3_ref[...]).astype(o_ref.dtype)


def _pick_batch_tile(B, requested):
    """Largest sublane-friendly tile <= requested. No forced 2-way split: on 1-TC
    parts (v5e/v6e) extra grid steps are pure overhead; on v7x, batches larger than
    the tile ceiling naturally produce >= 2 'parallel' tiles for megacore sharding."""
    tile = min(requested, B)
    if tile < B:
        tile = max(8, (tile // 8) * 8)   # keep (8, 128) BlockSpec rule when tiling
    return tile


def prepare_params(params, compute_dtype=jnp.float32):
    """One-time: zero-pad narrow contraction dims (64 / 32) up to 128 lanes and cast
    weights to the compute dtype. Zero padding does not change the math (padded h
    columns are exactly 0, padded weight rows are 0). Call once, reuse every step."""
    def pad_cols(a, cols):
        return jnp.pad(a, ((0, 0), (0, cols - a.shape[1])))

    def pad_rows(a, rows):
        return jnp.pad(a, ((0, rows - a.shape[0]), (0, 0)))

    w1 = pad_cols(params["w1"], _LANE).astype(compute_dtype)                    # (F, 128)
    b1 = pad_cols(params["b1"], _LANE).astype(jnp.float32)                      # (1, 128)
    w2 = pad_cols(pad_rows(params["w2"], _LANE), _LANE).astype(compute_dtype)   # (128, 128)
    b2 = pad_cols(params["b2"], _LANE).astype(jnp.float32)                      # (1, 128)
    w3 = pad_cols(pad_rows(params["w3"], _LANE), _LANE).astype(compute_dtype)   # (128, 128)
    b3 = params["b3"].astype(jnp.float32)                                       # (1, C)
    return {"w1": w1, "b1": b1, "w2": w2, "b2": b2, "w3": w3, "b3": b3}


@functools.partial(jax.jit, static_argnames=("batch_tile",))
def neural_net_forward(x, prepared, batch_tile=8192):
    """Forward pass of NeuralNet.

    x: (B, input_size) float32
    prepared: output of prepare_params()
    returns logits (B, C) float32
    """
    B, F = x.shape
    C = prepared["b3"].shape[1]
    w1, b1 = prepared["w1"], prepared["b1"]
    w2, b2 = prepared["w2"], prepared["b2"]
    w3, b3 = prepared["w3"], prepared["b3"]

    tile = _pick_batch_tile(B, batch_tile)
    n_tiles = pl.cdiv(B, tile)   # ragged last tile: OOB reads ignored, OOB writes dropped

    # Constant operands: revisited every grid step -> single-buffer them.
    def const_spec(shape):
        return pl.BlockSpec(shape, lambda i: (0, 0), pipeline_mode=pl.Buffered(1))

    grid_spec = pltpu.PrefetchScalarGridSpec(
        num_scalar_prefetch=0,
        grid=(n_tiles,),
        in_specs=[
            pl.BlockSpec((tile, F), lambda i: (i, 0)),   # x: the only streaming input
            const_spec(w1.shape), const_spec(b1.shape),
            const_spec(w2.shape), const_spec(b2.shape),
            const_spec(w3.shape), const_spec(b3.shape),
        ],
        out_specs=pl.BlockSpec((tile, C), lambda i: (i, 0)),   # slim (B, C) output
    )

    flops = 2 * B * (F * _H1 + _H1 * _H2 + _H2 * C)
    bytes_accessed = (
        x.size * x.dtype.itemsize                                   # f32 x in
        + B * C * 4                                                 # (B, C) f32 logits out
        + sum(a.size * a.dtype.itemsize for a in (w1, b1, w2, b2, w3, b3))
    )

    return pl.pallas_call(
        functools.partial(_mlp_kernel, num_classes=C),
        out_shape=jax.ShapeDtypeStruct((B, C), jnp.float32),
        grid_spec=grid_spec,
        compiler_params=pltpu.CompilerParams(
            dimension_semantics=("parallel",),
        ),
        cost_estimate=pl.CostEstimate(
            flops=flops, transcendentals=0, bytes_accessed=bytes_accessed),
    )(x, w1, b1, w2, b2, w3, b3)


def init_params(key, input_size, num_classes):
    """Deterministic init mimicking PyTorch nn.Linear default (uniform +-1/sqrt(fan_in))."""
    def linear_init(k, fan_in, fan_out):
        kw, kb = jax.random.split(k)
        bound = 1.0 / jnp.sqrt(fan_in)
        w = jax.random.uniform(kw, (fan_in, fan_out), jnp.float32, -bound, bound)
        b = jax.random.uniform(kb, (1, fan_out), jnp.float32, -bound, bound)
        return w, b

    k1, k2, k3 = jax.random.split(key, 3)
    w1, b1 = linear_init(k1, input_size, _H1)
    w2, b2 = linear_init(k2, _H1, _H2)
    w3, b3 = linear_init(k3, _H2, num_classes)
    return {"w1": w1, "b1": b1, "w2": w2, "b2": b2, "w3": w3, "b3": b3}


def reference_forward(x, p):
    h1 = jnp.maximum(x @ p["w1"] + p["b1"], 0.0)
    h2 = jnp.maximum(h1 @ p["w2"] + p["b2"], 0.0)
    return h2 @ p["w3"] + p["b3"]


if __name__ == "__main__":
    input_size = 16    # tabular feature count (df columns minus 'cluster')
    num_classes = 4    # len(np.unique(y)) in the original script

    key = jax.random.PRNGKey(0)
    kx, kp, kx2, kx3 = jax.random.split(key, 4)
    params = init_params(kp, input_size, num_classes)
    prepared = prepare_params(params)   # one-time padding/cast, outside the hot path

    # Small batch: single-tile path.
    x_small = jax.random.normal(kx, (8, input_size), jnp.float32)
    out_small = jax.block_until_ready(neural_net_forward(x_small, prepared))
    ref_small = reference_forward(x_small, params)
    assert out_small.shape == (8, num_classes)
    assert jnp.allclose(out_small, ref_small, atol=1e-2, rtol=1e-2), "mismatch (small batch)"

    # Larger batch: still one big tile (no forced split on single-TC parts).
    x_big = jax.random.normal(kx2, (256, input_size), jnp.float32)
    out_big = jax.block_until_ready(neural_net_forward(x_big, prepared))
    ref_big = reference_forward(x_big, params)
    assert out_big.shape == (256, num_classes)
    assert jnp.allclose(out_big, ref_big, atol=1e-2, rtol=1e-2), "mismatch (large batch)"

    # Ragged grid path: B not a multiple of the tile -> OOB rows must not leak.
    x_rag = jax.random.normal(kx3, (250, input_size), jnp.float32)
    out_rag = jax.block_until_ready(neural_net_forward(x_rag, prepared, batch_tile=64))
    ref_rag = reference_forward(x_rag, params)
    assert out_rag.shape == (250, num_classes)
    assert jnp.allclose(out_rag, ref_rag, atol=1e-2, rtol=1e-2), "mismatch (ragged batch)"

    print("KERNEL_OK")
</pallas_src>

<mosaic_0001>
module attributes {stable_mosaic.version = 11 : i64} {
  func.func @_mlp_kernel(%arg0: i32, %arg1: memref<8x16xf32, #tpu.memory_space<vmem>>, %arg2: memref<16x128xf32, #tpu.memory_space<vmem>>, %arg3: memref<1x128xf32, #tpu.memory_space<vmem>>, %arg4: memref<128x128xf32, #tpu.memory_space<vmem>>, %arg5: memref<1x128xf32, #tpu.memory_space<vmem>>, %arg6: memref<128x128xf32, #tpu.memory_space<vmem>>, %arg7: memref<1x4xf32, #tpu.memory_space<vmem>>, %arg8: memref<8x4xf32, #tpu.memory_space<vmem>>) attributes {dimension_semantics = [#tpu.dimension_semantics<parallel>], iteration_bounds = array<i64: 1>, scalar_prefetch = 0 : i64, scratch_operands = 0 : i64, tpu.core_type = #tpu.core_type<tc>, window_params = [{transform_indices = @transform_0, window_bounds = array<i64: 8, 16>}, {pipeline_mode = #tpu.pipeline_mode<synchronous>, transform_indices = @transform_1, window_bounds = array<i64: 16, 128>}, {pipeline_mode = #tpu.pipeline_mode<synchronous>, transform_indices = @transform_2, window_bounds = array<i64: 1, 128>}, {pipeline_mode = #tpu.pipeline_mode<synchronous>, transform_indices = @transform_3, window_bounds = array<i64: 128, 128>}, {pipeline_mode = #tpu.pipeline_mode<synchronous>, transform_indices = @transform_4, window_bounds = array<i64: 1, 128>}, {pipeline_mode = #tpu.pipeline_mode<synchronous>, transform_indices = @transform_5, window_bounds = array<i64: 128, 128>}, {pipeline_mode = #tpu.pipeline_mode<synchronous>, transform_indices = @transform_6, window_bounds = array<i64: 1, 4>}, {transform_indices = @transform_7, window_bounds = array<i64: 8, 4>}]} {
    %c0 = arith.constant 0 : index
    %c0_0 = arith.constant 0 : index
    %0 = vector.load %arg1[%c0, %c0_0] : memref<8x16xf32, #tpu.memory_space<vmem>>, vector<8x16xf32>
    %c0_1 = arith.constant 0 : index
    %c0_2 = arith.constant 0 : index
    %1 = vector.load %arg2[%c0_1, %c0_2] : memref<16x128xf32, #tpu.memory_space<vmem>>, vector<16x128xf32>
    %cst = arith.constant dense<0.000000e+00> : vector<8x128xf32>
    %2 = tpu.matmul %0, %1, %cst {dimension_numbers = #tpu.dot_dimension_numbers<[1], [0], [0], [1], [0, 0, 1, 1], [], []>} : vector<8x16xf32>, vector<16x128xf32>, vector<8x128xf32> -> vector<8x128xf32>
    %c0_3 = arith.constant 0 : index
    %c0_4 = arith.constant 0 : index
    %3 = vector.load %arg3[%c0_3, %c0_4] : memref<1x128xf32, #tpu.memory_space<vmem>>, vector<1x128xf32>
    %4 = vector.broadcast %3 : vector<1x128xf32> to vector<8x128xf32>
    %5 = arith.addf %2, %4 : vector<8x128xf32>
    %cst_5 = arith.constant 0.000000e+00 : f32
    %6 = vector.broadcast %cst_5 : f32 to vector<8x128xf32>
    %7 = arith.maximumf %5, %6 : vector<8x128xf32>
    %c0_6 = arith.constant 0 : index
    %c0_7 = arith.constant 0 : index
    %8 = vector.load %arg4[%c0_6, %c0_7] : memref<128x128xf32, #tpu.memory_space<vmem>>, vector<128x128xf32>
    %cst_8 = arith.constant dense<0.000000e+00> : vector<8x128xf32>
    %9 = tpu.matmul %7, %8, %cst_8 {dimension_numbers = #tpu.dot_dimension_numbers<[1], [0], [0], [1], [0, 0, 1, 1], [], []>} : vector<8x128xf32>, vector<128x128xf32>, vector<8x128xf32> -> vector<8x128xf32>
    %c0_9 = arith.constant 0 : index
    %c0_10 = arith.constant 0 : index
    %10 = vector.load %arg5[%c0_9, %c0_10] : memref<1x128xf32, #tpu.memory_space<vmem>>, vector<1x128xf32>
    %11 = vector.broadcast %10 : vector<1x128xf32> to vector<8x128xf32>
    %12 = arith.addf %9, %11 : vector<8x128xf32>
    %cst_11 = arith.constant 0.000000e+00 : f32
    %13 = vector.broadcast %cst_11 : f32 to vector<8x128xf32>
    %14 = arith.maximumf %12, %13 : vector<8x128xf32>
    %c0_12 = arith.constant 0 : index
    %c0_13 = arith.constant 0 : index
    %15 = vector.load %arg6[%c0_12, %c0_13] : memref<128x128xf32, #tpu.memory_space<vmem>>, vector<128x128xf32>
    %cst_14 = arith.constant dense<0.000000e+00> : vector<8x128xf32>
    %16 = tpu.matmul %14, %15, %cst_14 {dimension_numbers = #tpu.dot_dimension_numbers<[1], [0], [0], [1], [0, 0, 1, 1], [], []>} : vector<8x128xf32>, vector<128x128xf32>, vector<8x128xf32> -> vector<8x128xf32>
    %17 = vector.extract_strided_slice %16 {offsets = [0, 0], sizes = [8, 4], strides = [1, 1]} : vector<8x128xf32> to vector<8x4xf32>
    %c0_15 = arith.constant 0 : index
    %c0_16 = arith.constant 0 : index
    %18 = vector.load %arg7[%c0_15, %c0_16] : memref<1x4xf32, #tpu.memory_space<vmem>>, vector<1x4xf32>
    %19 = vector.broadcast %18 : vector<1x4xf32> to vector<8x4xf32>
    %20 = arith.addf %17, %19 : vector<8x4xf32>
    %c0_17 = arith.constant 0 : index
    %c0_18 = arith.constant 0 : index
    %21 = vector.load %arg8[%c0_17, %c0_18] : memref<8x4xf32, #tpu.memory_space<vmem>>, vector<8x4xf32>
    tpu.vector_store %arg8[%c0_17, %c0_18], %20 {strides = array<i32>} : memref<8x4xf32, #tpu.memory_space<vmem>>, vector<8x4xf32>,
    return
  }
  func.func @transform_0(%arg0: i32) -> (i32, i32) {
    %c0_i32 = arith.constant 0 : i32
    %c0_i32_0 = arith.constant 0 : i32
    return %arg0, %c0_i32 : i32, i32
  }
  func.func @transform_1(%arg0: i32) -> (i32, i32) {
    %c0_i32 = arith.constant 0 : i32
    %c0_i32_0 = arith.constant 0 : i32
    %c0_i32_1 = arith.constant 0 : i32
    return %c0_i32, %c0_i32_0 : i32, i32
  }
  func.func @transform_2(%arg0: i32) -> (i32, i32) {
    %c0_i32 = arith.constant 0 : i32
    %c0_i32_0 = arith.constant 0 : i32
    %c0_i32_1 = arith.constant 0 : i32
    return %c0_i32, %c0_i32_0 : i32, i32
  }
  func.func @transform_3(%arg0: i32) -> (i32, i32) {
    %c0_i32 = arith.constant 0 : i32
    %c0_i32_0 = arith.constant 0 : i32
    %c0_i32_1 = arith.constant 0 : i32
    return %c0_i32, %c0_i32_0 : i32, i32
  }
  func.func @transform_4(%arg0: i32) -> (i32, i32) {
    %c0_i32 = arith.constant 0 : i32
    %c0_i32_0 = arith.constant 0 : i32
    %c0_i32_1 = arith.constant 0 : i32
    return %c0_i32, %c0_i32_0 : i32, i32
  }
  func.func @transform_5(%arg0: i32) -> (i32, i32) {
    %c0_i32 = arith.constant 0 : i32
    %c0_i32_0 = arith.constant 0 : i32
    %c0_i32_1 = arith.constant 0 : i32
    return %c0_i32, %c0_i32_0 : i32, i32
  }
  func.func @transform_6(%arg0: i32) -> (i32, i32) {
    %c0_i32 = arith.constant 0 : i32
    %c0_i32_0 = arith.constant 0 : i32
    %c0_i32_1 = arith.constant 0 : i32
    return %c0_i32, %c0_i32_0 : i32, i32
  }
  func.func @transform_7(%arg0: i32) -> (i32, i32) {
    %c0_i32 = arith.constant 0 : i32
    %c0_i32_0 = arith.constant 0 : i32
    return %arg0, %c0_i32 : i32, i32
  }
}

</mosaic_0001>

<llo_original>
// kernel: neural_net_forward.1
$region0: #{neural_net_forward.1}
  #allocation0 [shape = 'u32[]', space=smem, size = 0x4, offset = 0x4, fixed_abs, tag = 'smem constant byte address 0x4 - core index']
  #allocation1 [shape = 'u32[144,128]{1,0:T(1,128)}', space=vmem, size = 0x12000, scoped, tag = 'internal scratch']
  %s0 = inlined_call_operand.hbm [shape: f32[8,16], index: 0, kind: input, shape index: {}]
  %s1 = inlined_call_operand.hbm [shape: f32[16,128], index: 1, kind: input, shape index: {}]
  %s2 = inlined_call_operand.vmem [shape: f32[1,128], index: 2, kind: input, shape index: {}]
  %s3 = inlined_call_operand.hbm [shape: f32[128,128], index: 3, kind: input, shape index: {}]
  %s4 = inlined_call_operand.vmem [shape: f32[1,128], index: 4, kind: input, shape index: {}]
  %s5 = inlined_call_operand.hbm [shape: f32[128,128], index: 5, kind: input, shape index: {}]
  %s6 = inlined_call_operand.vmem [shape: f32[1,4], index: 6, kind: input, shape index: {}]
  %s7 = inlined_call_operand.vmem [shape: f32[8,4], index: 7, kind: output, shape index: {}]
  %s8 = sld [smem:[#allocation0]]
  $region54: #{neural_net_forward.1} parent=0
    _
  %s10 = ssub.s32 1, %s8
  %s11 = scalar_select 0, %s10, %s8
  $region1: #{neural_net_forward.1} parent=0
    #allocation2 [shape = 'u8[4096]{0}', space=vmem, size = 0x1000, scoped, tag = 'input window, operand 0, single buffered']
    #allocation3 [shape = 's32[1]{0}', space=sflag, size = 0x4, scoped, tag = 'scoped memory for neural_net_forward.1']
    #allocation4 [shape = 'u8[8192]{0}', space=vmem, size = 0x2000, scoped, tag = 'input window, operand 1, single buffered']
    #allocation5 [shape = 's32[1]{0}', space=sflag, size = 0x4, scoped, tag = 'scoped memory for neural_net_forward.1']
    #allocation6 [shape = 'u8[65536]{0}', space=vmem, size = 0x10000, scoped, tag = 'input window, operand 3, single buffered']
    #allocation7 [shape = 'u8[65536]{0}', space=vmem, size = 0x10000, scoped, tag = 'input window, operand 5, single buffered']
    #allocation8 [shape = 's32[1]{0}', space=sflag, size = 0x4, scoped, tag = 'scoped memory for neural_net_forward.1']
    %12 = vsyncpa [#allocation3], 0
    %13 = vsyncpa [#allocation5], 0
    %14 = vsyncpa [#allocation8], 0
    // Predicated region
    $region2: #{neural_net_forward.1} parent=1 // pred_check
      _
    $region3: #{neural_net_forward.1} parent=1 // pred_check_branch
      %16 = sbr.rel (0) target = $region5
    $region4: #{neural_net_forward.1} parent=1 // pred_region
      %s18 = ssub.s32 128, 128
      %19 = vsyncadd [#allocation3], %s18
      %s21 = sshll.u32 [#allocation2], 4
      %s22 = int_to_ptr.vmem [resolvable:$true] %s21
      %24 = dma.hbm_to_vmem [thread:$0]  %s0, 128, %s22, [#allocation3]
    $region5: #{neural_net_forward.1} parent=1 // pred_fallthru
      _
    // Predicated region
    $region6: #{neural_net_forward.1} parent=1 // pred_check
      _
    $region7: #{neural_net_forward.1} parent=1 // pred_check_branch
      %26 = sbr.rel (0) target = $region9
    $region8: #{neural_net_forward.1} parent=1 // pred_region
      %s28 = ssub.s32 256, 256
      %29 = vsyncadd [#allocation5], %s28
      %s30 = sshll.u32 [#allocation4], 4
      %s31 = int_to_ptr.vmem [resolvable:$true] %s30
      %36 = dma.hbm_to_vmem [thread:$0]  %s1, 256, %s31, [#allocation5], 128, 128, 8
    $region9: #{neural_net_forward.1} parent=1 // pred_fallthru
      _
    // Predicated region
    $region10: #{neural_net_forward.1} parent=1 // pred_check
      _
    $region11: #{neural_net_forward.1} parent=1 // pred_check_branch
      %38 = sbr.rel (0) target = $region13
    $region12: #{neural_net_forward.1} parent=1 // pred_region
      _
    $region13: #{neural_net_forward.1} parent=1 // pred_fallthru
      _
    // Predicated region
    $region14: #{neural_net_forward.1} parent=1 // pred_check
      _
    $region15: #{neural_net_forward.1} parent=1 // pred_check_branch
      %40 = sbr.rel (0) target = $region17
    $region16: #{neural_net_forward.1} parent=1 // pred_region
      %s42 = ssub.s32 2048, 2048
      %43 = vsyncadd [#allocation5], %s42
      %s44 = sshll.u32 [#allocation6], 4
      %s45 = int_to_ptr.vmem [resolvable:$true] %s44
      %50 = dma.hbm_to_vmem [thread:$0]  %s3, 2048, %s45, [#allocation5], 128, 128, 8
    $region17: #{neural_net_forward.1} parent=1 // pred_fallthru
      _
    // Predicated region
    $region18: #{neural_net_forward.1} parent=1 // pred_check
      _
    $region19: #{neural_net_forward.1} parent=1 // pred_check_branch
      %52 = sbr.rel (0) target = $region21
    $region20: #{neural_net_forward.1} parent=1 // pred_region
      _
    $region21: #{neural_net_forward.1} parent=1 // pred_fallthru
      _
    // Predicated region
    $region22: #{neural_net_forward.1} parent=1 // pred_check
      _
    $region23: #{neural_net_forward.1} parent=1 // pred_check_branch
      %54 = sbr.rel (0) target = $region25
    $region24: #{neural_net_forward.1} parent=1 // pred_region
      %s56 = ssub.s32 2048, 2048
      %57 = vsyncadd [#allocation8], %s56
      %s58 = sshll.u32 [#allocation7], 4
      %s59 = int_to_ptr.vmem [resolvable:$true] %s58
      %64 = dma.hbm_to_vmem [thread:$0]  %s5, 2048, %s59, [#allocation8], 128, 128, 8
    $region25: #{neural_net_forward.1} parent=1 // pred_fallthru
      _
    // Predicated region
    $region26: #{neural_net_forward.1} parent=1 // pred_check
      _
    $region27: #{neural_net_forward.1} parent=1 // pred_check_branch
      %66 = sbr.rel (0) target = $region29
    $region28: #{neural_net_forward.1} parent=1 // pred_region
      _
    $region29: #{neural_net_forward.1} parent=1 // pred_fallthru
      _
    // Predicated region
    $region30: #{neural_net_forward.1} parent=1 // pred_check
      _
    $region31: #{neural_net_forward.1} parent=1 // pred_check_branch
      %68 = sbr.rel (0) target = $region33
    $region32: #{neural_net_forward.1} parent=1 // pred_region
      %69 = dma.done [#allocation3], 128
    $region33: #{neural_net_forward.1} parent=1 // pred_fallthru
      _
    // Predicated region
    $region34: #{neural_net_forward.1} parent=1 // pred_check
      _
    $region35: #{neural_net_forward.1} parent=1 // pred_check_branch
      %71 = sbr.rel (0) target = $region37
    $region36: #{neural_net_forward.1} parent=1 // pred_region
      %72 = dma.done [#allocation5], 256
    $region37: #{neural_net_forward.1} parent=1 // pred_fallthru
      _
    // Predicated region
    $region38: #{neural_net_forward.1} parent=1 // pred_check
      _
    $region39: #{neural_net_forward.1} parent=1 // pred_check_branch
      %74 = sbr.rel (0) target = $region41
    $region40: #{neural_net_forward.1} parent=1 // pred_region
      %75 = dma.done [#allocation5], 2048
    $region41: #{neural_net_forward.1} parent=1 // pred_fallthru
      _
    // Predicated region
    $region42: #{neural_net_forward.1} parent=1 // pred_check
      _
    $region43: #{neural_net_forward.1} parent=1 // pred_check_branch
      %77 = sbr.rel (0) target = $region45
    $region44: #{neural_net_forward.1} parent=1 // pred_region
      %78 = dma.done [#allocation8], 2048
    $region45: #{neural_net_forward.1} parent=1 // pred_fallthru
      _
    %v79 = vld [vmem:[#allocation2] sm:$0xff]
    %v80 = vld [vmem:[#allocation4] sm:$0xff]
    %v81 = vld [vmem:[#allocation4 + $0x8] sm:$0xff]
    %v82 = vld [vmem:[%s2] sm:$0x1]
    %v84 = vlaneseq
    %v85 = vshrl.u32 %v84, 7
    %v86 = vsub.s32 0, %v85
    %v87 = vrot.slane %v82, %v86
    %vm89 = vcmask 130048
    %v91 = vsel %vm89, %v79, 0
    %93 = vmatprep.subr.mxu0 0.0
    %94 = vmatpush1.msra.mxu0 0.0
    %95 = vmatprep.subr.mxu0 0.0
    %96 = vmatpush1.msra.mxu0 0.0
    %97 = vmatprep.subr.mxu0 0.0
    %98 = vmatpush1.msra.mxu0 0.0
    %99 = vmatprep.subr.mxu0 0.0
    %100 = vmatpush1.msra.mxu0 0.0
    %101 = vmatprep.subr.mxu0 0.0
    %102 = vmatpush1.msra.mxu0 0.0
    %103 = vmatprep.subr.mxu0 0.0
    %104 = vmatpush1.msra.mxu0 0.0
    %105 = vmatprep.subr.mxu0 0.0
    %106 = vmatpush1.msra.mxu0 0.0
    %107 = vmatprep.subr.mxu0 0.0
    %108 = vmatpush1.msra.mxu0 0.0
    %109 = vmatprep.subr.mxu0 0.0
    %110 = vmatpush1.msra.mxu0 0.0
    %111 = vmatprep.subr.mxu0 0.0
    %112 = vmatpush1.msra.mxu0 0.0
    %113 = vmatprep.subr.mxu0 0.0
    %114 = vmatpush1.msra.mxu0 0.0
    %115 = vmatprep.subr.mxu0 0.0
    %116 = vmatpush1.msra.mxu0 0.0
    %117 = vmatprep.subr.mxu0 0.0
    %118 = vmatpush1.msra.mxu0 0.0
    %119 = vmatprep.subr.mxu0 0.0
    %120 = vmatpush1.msra.mxu0 0.0
    %121 = vmatprep.subr.mxu0 0.0
    %122 = vmatpush1.msra.mxu0 %v81
    %123 = vmatprep.subr.mxu0 0.0
    %124 = vmatpush1.msra.mxu0 %v80
    %125 = vmatprep.subr.mxu0 0.0
    %126 = vmatpush2.msra.mxu0 0.0
    %127 = vmatprep.subr.mxu0 0.0
    %128 = vmatpush2.msra.mxu0 0.0
    %129 = vmatprep.subr.mxu0 0.0
    %130 = vmatpush2.msra.mxu0 0.0
    %131 = vmatprep.subr.mxu0 0.0
    %132 = vmatpush2.msra.mxu0 0.0
    %133 = vmatprep.subr.mxu0 0.0
    %134 = vmatpush2.msra.mxu0 0.0
    %135 = vmatprep.subr.mxu0 0.0
    %136 = vmatpush2.msra.mxu0 0.0
    %137 = vmatprep.subr.mxu0 0.0
    %138 = vmatpush2.msra.mxu0 0.0
    %139 = vmatprep.subr.mxu0 0.0
    %140 = vmatpush2.msra.mxu0 0.0
    %141 = vmatprep.subr.mxu0 0.0
    %142 = vmatpush2.msra.mxu0 0.0
    %143 = vmatprep.subr.mxu0 0.0
    %144 = vmatpush2.msra.mxu0 0.0
    %145 = vmatprep.subr.mxu0 0.0
    %146 = vmatpush2.msra.mxu0 0.0
    %147 = vmatprep.subr.mxu0 0.0
    %148 = vmatpush2.msra.mxu0 0.0
    %149 = vmatprep.subr.mxu0 0.0
    %150 = vmatpush2.msra.mxu0 0.0
    %151 = vmatprep.subr.mxu0 0.0
    %152 = vmatpush2.msra.mxu0 0.0
    %153 = vmatprep.subr.mxu0 0.0
    %154 = vmatpush2.msra.mxu0 0.0
    %155 = vmatprep.subr.mxu0 0.0
    %156 = vmatpush2.msra.mxu0 0.0
    %157 = vmatprep.mubr.f32.mxu0 0.0
    %158 = vmatmul.mubr.f32.gmra.mxu0 %v91
    %v159 = vpop.f32.mrf.mxu0
    %v160 = vadd.f32 %v87, %v159
    %v161 = vpop.f32.mrf.mxu0
    %162 = vdwg.mxu0
    %v163 = vmax.f32 %v160, 0.0
    %v164 = vld [vmem:[#allocation6] sm:$0xff]
    %v165 = vld [vmem:[#allocation6 + $0x8] sm:$0xff]
    %v166 = vld [vmem:[#allocation6 + $0x10] sm:$0xff]
    %v167 = vld [vmem:[#allocation6 + $0x18] sm:$0xff]
    %v168 = vld [vmem:[#allocation6 + $0x20] sm:$0xff]
    %v169 = vld [vmem:[#allocation6 + $0x28] sm:$0xff]
    %v170 = vld [vmem:[#allocation6 + $0x30] sm:$0xff]
    %v171 = vld [vmem:[#allocation6 + $0x38] sm:$0xff]
    %v172 = vld [vmem:[#allocation6 + $0x40] sm:$0xff]
    %v173 = vld [vmem:[#allocation6 + $0x48] sm:$0xff]
    %v174 = vld [vmem:[#allocation6 + $0x50] sm:$0xff]
    %v175 = vld [vmem:[#allocation6 + $0x58] sm:$0xff]
    %v176 = vld [vmem:[#allocation6 + $0x60] sm:$0xff]
    %v177 = vld [vmem:[#allocation6 + $0x68] sm:$0xff]
    %v178 = vld [vmem:[#allocation6 + $0x70] sm:$0xff]
    %v179 = vld [vmem:[#allocation6 + $0x78] sm:$0xff]
    %v180 = vld [vmem:[%s4] sm:$0x1]
    %v182 = vlaneseq
    %v183 = vshrl.u32 %v182, 7
    %v184 = vsub.s32 0, %v183
    %v185 = vrot.slane %v180, %v184
    %187 = vmatprep.subr.mxu0 0.0
    %188 = vmatpush1.msra.mxu0 %v179
    %189 = vmatprep.subr.mxu0 0.0
    %190 = vmatpush1.msra.mxu0 %v178
    %191 = vmatprep.subr.mxu0 0.0
    %192 = vmatpush1.msra.mxu0 %v177
    %193 = vmatprep.subr.mxu0 0.0
    %194 = vmatpush1.msra.mxu0 %v176
    %195 = vmatprep.subr.mxu0 0.0
    %196 = vmatpush1.msra.mxu0 %v175
    %197 = vmatprep.subr.mxu0 0.0
    %198 = vmatpush1.msra.mxu0 %v174
    %199 = vmatprep.subr.mxu0 0.0
    %200 = vmatpush1.msra.mxu0 %v173
    %201 = vmatprep.subr.mxu0 0.0
    %202 = vmatpush1.msra.mxu0 %v172
    %203 = vmatprep.subr.mxu0 0.0
    %204 = vmatpush1.msra.mxu0 %v171
    %205 = vmatprep.subr.mxu0 0.0
    %206 = vmatpush1.msra.mxu0 %v170
    %207 = vmatprep.subr.mxu0 0.0
    %208 = vmatpush1.msra.mxu0 %v169
    %209 = vmatprep.subr.mxu0 0.0
    %210 = vmatpush1.msra.mxu0 %v168
    %211 = vmatprep.subr.mxu0 0.0
    %212 = vmatpush1.msra.mxu0 %v167
    %213 = vmatprep.subr.mxu0 0.0
    %214 = vmatpush1.msra.mxu0 %v166
    %215 = vmatprep.subr.mxu0 0.0
    %216 = vmatpush1.msra.mxu0 %v165
    %217 = vmatprep.subr.mxu0 0.0
    %218 = vmatpush1.msra.mxu0 %v164
    %219 = vmatprep.subr.mxu0 0.0
    %220 = vmatpush2.msra.mxu0 0.0
    %221 = vmatprep.subr.mxu0 0.0
    %222 = vmatpush2.msra.mxu0 0.0
    %223 = vmatprep.subr.mxu0 0.0
    %224 = vmatpush2.msra.mxu0 0.0
    %225 = vmatprep.subr.mxu0 0.0
    %226 = vmatpush2.msra.mxu0 0.0
    %227 = vmatprep.subr.mxu0 0.0
    %228 = vmatpush2.msra.mxu0 0.0
    %229 = vmatprep.subr.mxu0 0.0
    %230 = vmatpush2.msra.mxu0 0.0
    %231 = vmatprep.subr.mxu0 0.0
    %232 = vmatpush2.msra.mxu0 0.0
    %233 = vmatprep.subr.mxu0 0.0
    %234 = vmatpush2.msra.mxu0 0.0
    %235 = vmatprep.subr.mxu0 0.0
    %236 = vmatpush2.msra.mxu0 0.0
    %237 = vmatprep.subr.mxu0 0.0
    %238 = vmatpush2.msra.mxu0 0.0
    %239 = vmatprep.subr.mxu0 0.0
    %240 = vmatpush2.msra.mxu0 0.0
    %241 = vmatprep.subr.mxu0 0.0
    %242 = vmatpush2.msra.mxu0 0.0
    %243 = vmatprep.subr.mxu0 0.0
    %244 = vmatpush2.msra.mxu0 0.0
    %245 = vmatprep.subr.mxu0 0.0
    %246 = vmatpush2.msra.mxu0 0.0
    %247 = vmatprep.subr.mxu0 0.0
    %248 = vmatpush2.msra.mxu0 0.0
    %249 = vmatprep.subr.mxu0 0.0
    %250 = vmatpush2.msra.mxu0 0.0
    %251 = vmatprep.mubr.f32.mxu0 0.0
    %252 = vmatmul.mubr.f32.gmra.mxu0 %v163
    %v253 = vpop.f32.mrf.mxu0
    %v254 = vadd.f32 %v185, %v253
    %v255 = vpop.f32.mrf.mxu0
    %256 = vdwg.mxu0
    %v257 = vmax.f32 %v254, 0.0
    %v258 = vld [vmem:[#allocation7] sm:$0xff]
    %v259 = vld [vmem:[#allocation7 + $0x8] sm:$0xff]
    %v260 = vld [vmem:[#allocation7 + $0x10] sm:$0xff]
    %v261 = vld [vmem:[#allocation7 + $0x18] sm:$0xff]
    %v262 = vld [vmem:[#allocation7 + $0x20] sm:$0xff]
    %v263 = vld [vmem:[#allocation7 + $0x28] sm:$0xff]
    %v264 = vld [vmem:[#allocation7 + $0x30] sm:$0xff]
    %v265 = vld [vmem:[#allocation7 + $0x38] sm:$0xff]
    %v266 = vld [vmem:[#allocation7 + $0x40] sm:$0xff]
    %v267 = vld [vmem:[#allocation7 + $0x48] sm:$0xff]
    %v268 = vld [vmem:[#allocation7 + $0x50] sm:$0xff]
    %v269 = vld [vmem:[#allocation7 + $0x58] sm:$0xff]
    %v270 = vld [vmem:[#allocation7 + $0x60] sm:$0xff]
    %v271 = vld [vmem:[#allocation7 + $0x68] sm:$0xff]
    %v272 = vld [vmem:[#allocation7 + $0x70] sm:$0xff]
    %v273 = vld [vmem:[#allocation7 + $0x78] sm:$0xff]
    %274 = vmatprep.subr.mxu0 0.0
    %275 = vmatpush1.msra.mxu0 %v273
    %276 = vmatprep.subr.mxu0 0.0
    %277 = vmatpush1.msra.mxu0 %v272
    %278 = vmatprep.subr.mxu0 0.0
    %279 = vmatpush1.msra.mxu0 %v271
    %280 = vmatprep.subr.mxu0 0.0
    %281 = vmatpush1.msra.mxu0 %v270
    %282 = vmatprep.subr.mxu0 0.0
    %283 = vmatpush1.msra.mxu0 %v269
    %284 = vmatprep.subr.mxu0 0.0
    %285 = vmatpush1.msra.mxu0 %v268
    %286 = vmatprep.subr.mxu0 0.0
    %287 = vmatpush1.msra.mxu0 %v267
    %288 = vmatprep.subr.mxu0 0.0
    %289 = vmatpush1.msra.mxu0 %v266
    %290 = vmatprep.subr.mxu0 0.0
    %291 = vmatpush1.msra.mxu0 %v265
    %292 = vmatprep.subr.mxu0 0.0
    %293 = vmatpush1.msra.mxu0 %v264
    %294 = vmatprep.subr.mxu0 0.0
    %295 = vmatpush1.msra.mxu0 %v263
    %296 = vmatprep.subr.mxu0 0.0
    %297 = vmatpush1.msra.mxu0 %v262
    %298 = vmatprep.subr.mxu0 0.0
    %299 = vmatpush1.msra.mxu0 %v261
    %300 = vmatprep.subr.mxu0 0.0
    %301 = vmatpush1.msra.mxu0 %v260
    %302 = vmatprep.subr.mxu0 0.0
    %303 = vmatpush1.msra.mxu0 %v259
    %304 = vmatprep.subr.mxu0 0.0
    %305 = vmatpush1.msra.mxu0 %v258
    %306 = vmatprep.subr.mxu0 0.0
    %307 = vmatpush2.msra.mxu0 0.0
    %308 = vmatprep.subr.mxu0 0.0
    %309 = vmatpush2.msra.mxu0 0.0
    %310 = vmatprep.subr.mxu0 0.0
    %311 = vmatpush2.msra.mxu0 0.0
    %312 = vmatprep.subr.mxu0 0.0
    %313 = vmatpush2.msra.mxu0 0.0
    %314 = vmatprep.subr.mxu0 0.0
    %315 = vmatpush2.msra.mxu0 0.0
    %316 = vmatprep.subr.mxu0 0.0
    %317 = vmatpush2.msra.mxu0 0.0
    %318 = vmatprep.subr.mxu0 0.0
    %319 = vmatpush2.msra.mxu0 0.0
    %320 = vmatprep.subr.mxu0 0.0
    %321 = vmatpush2.msra.mxu0 0.0
    %322 = vmatprep.subr.mxu0 0.0
    %323 = vmatpush2.msra.mxu0 0.0
    %324 = vmatprep.subr.mxu0 0.0
    %325 = vmatpush2.msra.mxu0 0.0
    %326 = vmatprep.subr.mxu0 0.0
    %327 = vmatpush2.msra.mxu0 0.0
    %328 = vmatprep.subr.mxu0 0.0
    %329 = vmatpush2.msra.mxu0 0.0
    %330 = vmatprep.subr.mxu0 0.0
    %331 = vmatpush2.msra.mxu0 0.0
    %332 = vmatprep.subr.mxu0 0.0
    %333 = vmatpush2.msra.mxu0 0.0
    %334 = vmatprep.subr.mxu0 0.0
    %335 = vmatpush2.msra.mxu0 0.0
    %336 = vmatprep.subr.mxu0 0.0
    %337 = vmatpush2.msra.mxu0 0.0
    %338 = vmatprep.mubr.f32.mxu0 0.0
    %339 = vmatmul.mubr.f32.gmra.mxu0 %v257
    %v340 = vpop.f32.mrf.mxu0
    %v341 = vadd.f32 0.0, %v340
    %v342 = vpop.f32.mrf.mxu0
    %343 = vdwg.mxu0
    %v344 = vld [vmem:[%s6] sm:$0x1]
    %v346 = vlaneseq
    %v347 = vshrl.u32 %v346, 7
    %v348 = vsub.s32 0, %v347
    %v349 = vrot.slane %v344, %v348
    %v351 = vadd.f32 %v341, %v349
    %vm352 = vcmask 31744
    %353 = vst.msk [vmem:[%s7] sm:$0xff] %vm352, %v351
    // Predicated region
    $region46: #{neural_net_forward.1} parent=1 // pred_check
      _
    $region47: #{neural_net_forward.1} parent=1 // pred_check_branch
      %355 = sbr.rel (0) target = $region49
    $region48: #{neural_net_forward.1} parent=1 // pred_region
      _
    $region49: #{neural_net_forward.1} parent=1 // pred_fallthru
      _
    // Predicated region
    $region50: #{neural_net_forward.1} parent=1 // pred_check
      _
    $region51: #{neural_net_forward.1} parent=1 // pred_check_branch
      %357 = sbr.rel (0) target = $region53
    $region52: #{neural_net_forward.1} parent=1 // pred_region
      _
    $region53: #{neural_net_forward.1} parent=1 // pred_fallthru
      _
    %358 = vsyncpa [#allocation3], 1
    %359 = vsyncpa [#allocation5], 1
    %360 = vsyncpa [#allocation8], 1

</llo_original>
